<compile_context>
chip_gen: v5e
topology: v5e:2x2
jax: 0.10.0
libtpu: 0.0.40
codegen_flags: <defaults>
</compile_context>

<pallas_src>
import re

import jax
import jax.numpy as jnp
from jax.experimental import pallas as pl
from jax.experimental.pallas import tpu as pltpu


HIDDEN_UNITS = (100, 100)   # module default
HIDDEN_PAD = 128            # hidden width padded to a full lane tile
_LANES = 128


def _tpu_generation():
    try:
        kind = jax.devices()[0].device_kind.lower()
    except Exception:
        return 6
    m = re.search(r"(\d+)", kind)
    return int(m.group(1)) if m else 6


_GEN = _tpu_generation()

if _GEN >= 7:
    # v7x: 64 MiB physical VMEM per TC -> smaller tiles, conservative limit.
    _MAX_TILE_ROWS = 4096
    _VMEM_LIMIT = 48 * 1024 * 1024
else:
    # v5e/v6e: 128 MiB physical -> big tiles; raise the 16/32 MiB scoped default.
    _MAX_TILE_ROWS = 8192
    _VMEM_LIMIT = 64 * 1024 * 1024

# bf16 EUP (tanh) exists on v6e/v7x; v5e and older stay in f32.
_ACT_DTYPE = jnp.bfloat16 if _GEN >= 6 else jnp.float32
# v7x has 2 TensorCores: force >= 2 grid steps for non-trivial batches.
_MIN_TILES = 2 if _GEN >= 7 else 1
_MIN_SPLIT_BATCH = 512


def _qmlp_kernel(x_ref, w1_ref, b1_ref, w2_ref, b2_ref, w3_ref, b3_ref, out_ref):
    # Layer 1: single K=(state_dim+action_dim) MXU dot (concat fused wrapper-side),
    # bf16 inputs, f32 accumulation.
    z1 = jnp.dot(x_ref[...], w1_ref[...], preferred_element_type=jnp.float32)
    h1 = jnp.tanh((z1 + b1_ref[...]).astype(_ACT_DTYPE))        # EUP (bf16 on v6e/v7x)

    # Layer 2: full-lane 128x128 MXU tile.
    z2 = jnp.dot(h1.astype(jnp.bfloat16), w2_ref[...],
                 preferred_element_type=jnp.float32)
    h2 = jnp.tanh((z2 + b2_ref[...]).astype(_ACT_DTYPE))

    # Layer 3 (128 -> 1) on the MXU: no transpose, (tile_b, 1) output block.
    q = jnp.dot(h2.astype(jnp.bfloat16), w3_ref[...],
                preferred_element_type=jnp.float32)
    out_ref[...] = (q + b3_ref[...]).astype(out_ref.dtype)


def _round_up(x, m):
    return ((x + m - 1) // m) * m


def _tiling(batch):
    """Returns (padded_batch, tile_rows); padded_batch is a multiple of tile_rows."""
    min_tiles = _MIN_TILES if batch > _MIN_SPLIT_BATCH else 1
    num_tiles = max(min_tiles, pl.cdiv(batch, _MAX_TILE_ROWS))
    # Balanced tiles (lane-multiple), capped by the generation-aware max.
    tile = min(_MAX_TILE_ROWS, _round_up(pl.cdiv(batch, num_tiles), _LANES))
    b_pad = _round_up(batch, tile)
    return b_pad, tile


def init_params(key, state_dim, action_dim, hidden_units=HIDDEN_UNITS):
    """Matches nn.Linear default init U[-1/sqrt(fan_in), +1/sqrt(fan_in)].

    Weights are stored as [in_features, out_features] (transposed vs PyTorch).
    """
    dims = (state_dim + action_dim,) + tuple(hidden_units) + (1,)
    params = []
    for i in range(len(dims) - 1):
        fan_in, fan_out = dims[i], dims[i + 1]
        key, wk, bk = jax.random.split(key, 3)
        bound = 1.0 / float(fan_in) ** 0.5
        w = jax.random.uniform(wk, (fan_in, fan_out), jnp.float32, -bound, bound)
        b = jax.random.uniform(bk, (1, fan_out), jnp.float32, -bound, bound)
        params.append((w, b))
    return params


def prepare_kernel_params(params, hidden_pad=HIDDEN_PAD):
    """Zero-pad hidden 100 -> 128 (semantics-preserving: tanh(0)=0) and cast MXU
    operands to bf16; biases stay f32."""
    (w1, b1), (w2, b2), (w3, b3) = params
    h = w1.shape[1]
    pc = hidden_pad - h
    w1p = jnp.pad(w1, ((0, 0), (0, pc))).astype(jnp.bfloat16)     # (in, 128)  bf16
    b1p = jnp.pad(b1, ((0, 0), (0, pc)))                          # (1, 128)   f32
    w2p = jnp.pad(w2, ((0, pc), (0, pc))).astype(jnp.bfloat16)    # (128, 128) bf16
    b2p = jnp.pad(b2, ((0, 0), (0, pc)))                          # (1, 128)   f32
    w3p = jnp.pad(w3, ((0, pc), (0, 0))).astype(jnp.bfloat16)     # (128, 1)   bf16
    b3p = b3.reshape(1, 1)                                        # (1, 1)     f32
    return (w1p, b1p, w2p, b2p, w3p, b3p)


@jax.jit
def state_action_function(states, actions, kernel_params):
    """Pallas forward: q = MLP([states, actions]).  Returns [B, 1] float32."""
    w1, b1, w2, b2, w3, b3 = kernel_params
    batch = states.shape[0]
    in_dim = w1.shape[0]
    hp = w2.shape[0]

    b_pad, tile_b = _tiling(batch)
    # Fused concat: single (B, state+action) bf16 input (kernel is not HBM-bound).
    x = jnp.concatenate([states, actions], axis=-1).astype(jnp.bfloat16)
    if b_pad != batch:
        x = jnp.pad(x, ((0, b_pad - batch), (0, 0)))
    num_tiles = b_pad // tile_b

    batch_blk = lambda i: (i, 0)     # noqa: E731  (tiled along the batch axis)
    resident = lambda i: (0, 0)      # noqa: E731  (same block every step -> stays in VMEM)

    grid_spec = pltpu.PrefetchScalarGridSpec(
        num_scalar_prefetch=0,
        grid=(num_tiles,),
        in_specs=[
            pl.BlockSpec((tile_b, in_dim), batch_blk),
            pl.BlockSpec((in_dim, hp), resident),
            pl.BlockSpec((1, hp), resident),
            pl.BlockSpec((hp, hp), resident),
            pl.BlockSpec((1, hp), resident),
            pl.BlockSpec((hp, 1), resident),
            pl.BlockSpec((1, 1), resident),
        ],
        out_specs=pl.BlockSpec((tile_b, 1), batch_blk),
    )

    q = pl.pallas_call(
        _qmlp_kernel,
        out_shape=jax.ShapeDtypeStruct((b_pad, 1), jnp.float32),
        grid_spec=grid_spec,
        compiler_params=pltpu.CompilerParams(
            dimension_semantics=("parallel",),
            vmem_limit_bytes=_VMEM_LIMIT),
    )(x, w1, b1, w2, b2, w3, b3)

    return q[:batch]


def _reference(states, actions, params):
    x = jnp.concatenate([states, actions], axis=-1)
    (w1, b1), (w2, b2), (w3, b3) = params
    h1 = jnp.tanh(x @ w1 + b1)
    h2 = jnp.tanh(h1 @ w2 + b2)
    return h2 @ w3 + b3


if __name__ == "__main__":
    key = jax.random.PRNGKey(0)
    k_s, k_a, k_p = jax.random.split(key, 3)

    batch = 8
    state_dim = 16   # state_shape = (16,)
    action_dim = 8   # action_shape = (8,)

    states = jax.random.normal(k_s, (batch, state_dim), jnp.float32)
    actions = jax.random.normal(k_a, (batch, action_dim), jnp.float32)
    params = init_params(k_p, state_dim, action_dim)
    kernel_params = prepare_kernel_params(params)

    q = state_action_function(states, actions, kernel_params)
    q = jax.block_until_ready(q)

    q_ref = _reference(states, actions, params)
    assert q.shape == (batch, 1)
    # bf16 MXU operands (and bf16 tanh on v6e/v7x) -> loosened tolerance vs f32 ref.
    assert jnp.allclose(q, q_ref, atol=5e-2, rtol=5e-2), "mismatch vs reference"

    print("KERNEL_OK")
</pallas_src>

<mosaic_0001>
module attributes {stable_mosaic.version = 11 : i64} {
  func.func @_qmlp_kernel(%arg0: i32, %arg1: memref<128x24xbf16, #tpu.memory_space<vmem>>, %arg2: memref<24x128xbf16, #tpu.memory_space<vmem>>, %arg3: memref<1x128xf32, #tpu.memory_space<vmem>>, %arg4: memref<128x128xbf16, #tpu.memory_space<vmem>>, %arg5: memref<1x128xf32, #tpu.memory_space<vmem>>, %arg6: memref<128x1xbf16, #tpu.memory_space<vmem>>, %arg7: memref<1x1xf32, #tpu.memory_space<vmem>>, %arg8: memref<128x1xf32, #tpu.memory_space<vmem>>) attributes {dimension_semantics = [#tpu.dimension_semantics<parallel>], iteration_bounds = array<i64: 1>, scalar_prefetch = 0 : i64, scratch_operands = 0 : i64, tpu.core_type = #tpu.core_type<tc>, window_params = [{transform_indices = @transform_0, window_bounds = array<i64: 128, 24>}, {pipeline_mode = #tpu.pipeline_mode<synchronous>, transform_indices = @transform_1, window_bounds = array<i64: 24, 128>}, {pipeline_mode = #tpu.pipeline_mode<synchronous>, transform_indices = @transform_2, window_bounds = array<i64: 1, 128>}, {pipeline_mode = #tpu.pipeline_mode<synchronous>, transform_indices = @transform_3, window_bounds = array<i64: 128, 128>}, {pipeline_mode = #tpu.pipeline_mode<synchronous>, transform_indices = @transform_4, window_bounds = array<i64: 1, 128>}, {pipeline_mode = #tpu.pipeline_mode<synchronous>, transform_indices = @transform_5, window_bounds = array<i64: 128, 1>}, {pipeline_mode = #tpu.pipeline_mode<synchronous>, transform_indices = @transform_6, window_bounds = array<i64: 1, 1>}, {transform_indices = @transform_7, window_bounds = array<i64: 128, 1>}]} {
    %c0 = arith.constant 0 : index
    %c0_0 = arith.constant 0 : index
    %0 = vector.load %arg1[%c0, %c0_0] : memref<128x24xbf16, #tpu.memory_space<vmem>>, vector<128x24xbf16>
    %c0_1 = arith.constant 0 : index
    %c0_2 = arith.constant 0 : index
    %1 = vector.load %arg2[%c0_1, %c0_2] : memref<24x128xbf16, #tpu.memory_space<vmem>>, vector<24x128xbf16>
    %cst = arith.constant dense<0.000000e+00> : vector<128x128xf32>
    %2 = tpu.matmul %0, %1, %cst {dimension_numbers = #tpu.dot_dimension_numbers<[1], [0], [0], [1], [0, 0, 1, 1], [], []>} : vector<128x24xbf16>, vector<24x128xbf16>, vector<128x128xf32> -> vector<128x128xf32>
    %c0_3 = arith.constant 0 : index
    %c0_4 = arith.constant 0 : index
    %3 = vector.load %arg3[%c0_3, %c0_4] : memref<1x128xf32, #tpu.memory_space<vmem>>, vector<1x128xf32>
    %4 = vector.broadcast %3 : vector<1x128xf32> to vector<128x128xf32>
    %5 = arith.addf %2, %4 : vector<128x128xf32>
    %6 = arith.truncf %5 : vector<128x128xf32> to vector<128x128xbf16>
    %7 = math.tanh %6 : vector<128x128xbf16>
    %c0_5 = arith.constant 0 : index
    %c0_6 = arith.constant 0 : index
    %8 = vector.load %arg4[%c0_5, %c0_6] : memref<128x128xbf16, #tpu.memory_space<vmem>>, vector<128x128xbf16>
    %cst_7 = arith.constant dense<0.000000e+00> : vector<128x128xf32>
    %9 = tpu.matmul %7, %8, %cst_7 {dimension_numbers = #tpu.dot_dimension_numbers<[1], [0], [0], [1], [0, 0, 1, 1], [], []>} : vector<128x128xbf16>, vector<128x128xbf16>, vector<128x128xf32> -> vector<128x128xf32>
    %c0_8 = arith.constant 0 : index
    %c0_9 = arith.constant 0 : index
    %10 = vector.load %arg5[%c0_8, %c0_9] : memref<1x128xf32, #tpu.memory_space<vmem>>, vector<1x128xf32>
    %11 = vector.broadcast %10 : vector<1x128xf32> to vector<128x128xf32>
    %12 = arith.addf %9, %11 : vector<128x128xf32>
    %13 = arith.truncf %12 : vector<128x128xf32> to vector<128x128xbf16>
    %14 = math.tanh %13 : vector<128x128xbf16>
    %c0_10 = arith.constant 0 : index
    %c0_11 = arith.constant 0 : index
    %15 = vector.load %arg6[%c0_10, %c0_11] : memref<128x1xbf16, #tpu.memory_space<vmem>>, vector<128x1xbf16>
    %cst_12 = arith.constant dense<0.000000e+00> : vector<128x1xf32>
    %16 = tpu.matmul %14, %15, %cst_12 {dimension_numbers = #tpu.dot_dimension_numbers<[1], [0], [0], [1], [0, 0, 1, 1], [], []>} : vector<128x128xbf16>, vector<128x1xbf16>, vector<128x1xf32> -> vector<128x1xf32>
    %c0_13 = arith.constant 0 : index
    %c0_14 = arith.constant 0 : index
    %17 = vector.load %arg7[%c0_13, %c0_14] : memref<1x1xf32, #tpu.memory_space<vmem>>, vector<1x1xf32>
    %18 = vector.broadcast %17 : vector<1x1xf32> to vector<128x1xf32>
    %19 = arith.addf %16, %18 : vector<128x1xf32>
    %c0_15 = arith.constant 0 : index
    %c0_16 = arith.constant 0 : index
    %20 = vector.load %arg8[%c0_15, %c0_16] : memref<128x1xf32, #tpu.memory_space<vmem>>, vector<128x1xf32>
    tpu.vector_store %arg8[%c0_15, %c0_16], %19 {strides = array<i32>} : memref<128x1xf32, #tpu.memory_space<vmem>>, vector<128x1xf32>,
    return
  }
  func.func @transform_0(%arg0: i32) -> (i32, i32) {
    %c0_i32 = arith.constant 0 : i32
    %c0_i32_0 = arith.constant 0 : i32
    return %arg0, %c0_i32 : i32, i32
  }
  func.func @transform_1(%arg0: i32) -> (i32, i32) {
    %c0_i32 = arith.constant 0 : i32
    %c0_i32_0 = arith.constant 0 : i32
    %c0_i32_1 = arith.constant 0 : i32
    return %c0_i32, %c0_i32_0 : i32, i32
  }
  func.func @transform_2(%arg0: i32) -> (i32, i32) {
    %c0_i32 = arith.constant 0 : i32
    %c0_i32_0 = arith.constant 0 : i32
    %c0_i32_1 = arith.constant 0 : i32
    return %c0_i32, %c0_i32_0 : i32, i32
  }
  func.func @transform_3(%arg0: i32) -> (i32, i32) {
    %c0_i32 = arith.constant 0 : i32
    %c0_i32_0 = arith.constant 0 : i32
    %c0_i32_1 = arith.constant 0 : i32
    return %c0_i32, %c0_i32_0 : i32, i32
  }
  func.func @transform_4(%arg0: i32) -> (i32, i32) {
    %c0_i32 = arith.constant 0 : i32
    %c0_i32_0 = arith.constant 0 : i32
    %c0_i32_1 = arith.constant 0 : i32
    return %c0_i32, %c0_i32_0 : i32, i32
  }
  func.func @transform_5(%arg0: i32) -> (i32, i32) {
    %c0_i32 = arith.constant 0 : i32
    %c0_i32_0 = arith.constant 0 : i32
    %c0_i32_1 = arith.constant 0 : i32
    return %c0_i32, %c0_i32_0 : i32, i32
  }
  func.func @transform_6(%arg0: i32) -> (i32, i32) {
    %c0_i32 = arith.constant 0 : i32
    %c0_i32_0 = arith.constant 0 : i32
    %c0_i32_1 = arith.constant 0 : i32
    return %c0_i32, %c0_i32_0 : i32, i32
  }
  func.func @transform_7(%arg0: i32) -> (i32, i32) {
    %c0_i32 = arith.constant 0 : i32
    %c0_i32_0 = arith.constant 0 : i32
    return %arg0, %c0_i32 : i32, i32
  }
}

</mosaic_0001>

<llo_original>
// kernel: state_action_function.1
$region0: #{state_action_function.1}
  #allocation0 [shape = 'u32[]', space=smem, size = 0x4, offset = 0x4, fixed_abs, tag = 'smem constant byte address 0x4 - core index']
  #allocation1 [shape = 'u32[72,128]{1,0:T(1,128)}', space=vmem, size = 0x9000, scoped, tag = 'internal scratch']
  #allocation2 [shape = 'f32[1,1]{1,0:T(1,128)S(1)}', space=vmem, size = 0x200, scoped, tag = 'scoped memory for state_action_function.1']
  %s0 = inlined_call_operand.vmem [shape: bf16[128,24], index: 0, kind: input, shape index: {}]
  %s1 = inlined_call_operand.vmem [shape: bf16[24,128], index: 1, kind: input, shape index: {}]
  %s2 = inlined_call_operand.vmem [shape: f32[1,128], index: 2, kind: input, shape index: {}]
  %s3 = inlined_call_operand.vmem [shape: bf16[128,128], index: 3, kind: input, shape index: {}]
  %s4 = inlined_call_operand.vmem [shape: f32[1,128], index: 4, kind: input, shape index: {}]
  %s5 = inlined_call_operand.vmem [shape: bf16[128,1], index: 5, kind: input, shape index: {}]
  %s6 = inlined_call_operand.<no memory space> [shape: f32[1,1], index: 6, kind: input, shape index: {}]
  %s7 = inlined_call_operand.vmem [shape: f32[128,1], index: 7, kind: output, shape index: {}]
  %s8 = sld [smem:[#allocation0]]
  $region38: #{state_action_function.1} parent=0
    _
  %s10 = ssub.s32 1, %s8
  %s11 = scalar_select 0, %s10, %s8
  %v12 = vstv %s6
  %13 = vst [vmem:[#allocation2] sm:$0x1] %v12
  // Predicated region
  $region2: #{state_action_function.1} parent=0 // pred_check
    _
  $region3: #{state_action_function.1} parent=0 // pred_check_branch
    %15 = sbr.rel (0) target = $region5
  $region4: #{state_action_function.1} parent=0 // pred_region
    _
  $region5: #{state_action_function.1} parent=0 // pred_fallthru
    _
  // Predicated region
  $region6: #{state_action_function.1} parent=0 // pred_check
    _
  $region7: #{state_action_function.1} parent=0 // pred_check_branch
    %17 = sbr.rel (0) target = $region9
  $region8: #{state_action_function.1} parent=0 // pred_region
    _
  $region9: #{state_action_function.1} parent=0 // pred_fallthru
    _
  // Predicated region
  $region10: #{state_action_function.1} parent=0 // pred_check
    _
  $region11: #{state_action_function.1} parent=0 // pred_check_branch
    %19 = sbr.rel (0) target = $region13
  $region12: #{state_action_function.1} parent=0 // pred_region
    _
  $region13: #{state_action_function.1} parent=0 // pred_fallthru
    _
  // Predicated region
  $region14: #{state_action_function.1} parent=0 // pred_check
    _
  $region15: #{state_action_function.1} parent=0 // pred_check_branch
    %21 = sbr.rel (0) target = $region17
  $region16: #{state_action_function.1} parent=0 // pred_region
    _
  $region17: #{state_action_function.1} parent=0 // pred_fallthru
    _
  // Predicated region
  $region18: #{state_action_function.1} parent=0 // pred_check
    _
  $region19: #{state_action_function.1} parent=0 // pred_check_branch
    %23 = sbr.rel (0) target = $region21
  $region20: #{state_action_function.1} parent=0 // pred_region
    _
  $region21: #{state_action_function.1} parent=0 // pred_fallthru
    _
  // Predicated region
  $region22: #{state_action_function.1} parent=0 // pred_check
    _
  $region23: #{state_action_function.1} parent=0 // pred_check_branch
    %25 = sbr.rel (0) target = $region25
  $region24: #{state_action_function.1} parent=0 // pred_region
    _
  $region25: #{state_action_function.1} parent=0 // pred_fallthru
    _
  // Predicated region
  $region26: #{state_action_function.1} parent=0 // pred_check
    _
  $region27: #{state_action_function.1} parent=0 // pred_check_branch
    %27 = sbr.rel (0) target = $region29
  $region28: #{state_action_function.1} parent=0 // pred_region
    _
  $region29: #{state_action_function.1} parent=0 // pred_fallthru
    _
  %v29 = vld [vmem:[%s0] sm:$0xf]
  %v30 = vld [vmem:[%s0 + $0x4] sm:$0xf]
  %v31 = vld [vmem:[%s0 + $0x8] sm:$0xf]
  %v32 = vld [vmem:[%s0 + $0xc] sm:$0xf]
  %v33 = vld [vmem:[%s0 + $0x10] sm:$0xf]
  %v34 = vld [vmem:[%s0 + $0x14] sm:$0xf]
  %v35 = vld [vmem:[%s0 + $0x18] sm:$0xf]
  %v36 = vld [vmem:[%s0 + $0x1c] sm:$0xf]
  %v37 = vld [vmem:[%s0 + $0x20] sm:$0xf]
  %v38 = vld [vmem:[%s0 + $0x24] sm:$0xf]
  %v39 = vld [vmem:[%s0 + $0x28] sm:$0xf]
  %v40 = vld [vmem:[%s0 + $0x2c] sm:$0xf]
  %v41 = vld [vmem:[%s0 + $0x30] sm:$0xf]
  %v42 = vld [vmem:[%s0 + $0x34] sm:$0xf]
  %v43 = vld [vmem:[%s0 + $0x38] sm:$0xf]
  %v44 = vld [vmem:[%s0 + $0x3c] sm:$0xf]
  %v45 = vld [vmem:[%s1] sm:$0xf]
  %v46 = vld [vmem:[%s1 + $0x4] sm:$0xf]
  %v47 = vld [vmem:[%s1 + $0x8] sm:$0xf]
  %v48 = vld [vmem:[%s2] sm:$0x1]
  %v50 = vperm.slane %v48, 0
  %v68 = vunpack.c.l.b16 %v29
  %v69 = vunpack.c.l.b16 %v30
  %v70 = vunpack.c.l.b16 %v31
  %v71 = vunpack.c.l.b16 %v32
  %v72 = vunpack.c.l.b16 %v33
  %v73 = vunpack.c.l.b16 %v34
  %v74 = vunpack.c.l.b16 %v35
  %v75 = vunpack.c.l.b16 %v36
  %v76 = vunpack.c.l.b16 %v37
  %v77 = vunpack.c.l.b16 %v38
  %v78 = vunpack.c.l.b16 %v39
  %v79 = vunpack.c.l.b16 %v40
  %v80 = vunpack.c.l.b16 %v41
  %v81 = vunpack.c.l.b16 %v42
  %v82 = vunpack.c.l.b16 %v43
  %v83 = vunpack.c.l.b16 %v44
  %v84 = vpack.c.b16 %v69, %v68
  %v85 = vpack.c.b16 %v71, %v70
  %v86 = vpack.c.b16 %v73, %v72
  %v87 = vpack.c.b16 %v75, %v74
  %v88 = vpack.c.b16 %v77, %v76
  %v89 = vpack.c.b16 %v79, %v78
  %v90 = vpack.c.b16 %v81, %v80
  %v91 = vpack.c.b16 %v83, %v82
  %v95 = vunpack.c.l.b16 %v45
  %v96 = vunpack.c.l.b16 %v46
  %v97 = vunpack.c.l.b16 %v47
  %v98 = vpack.c.b16 %v96, %v95
  %v99 = vpack.c.b16 %v97, %v97
  %vm101 = vcmask 195584
  %v103 = vsel %vm101, %v84, 0
  %v106 = vsel %vm101, %v85, 0
  %v109 = vsel %vm101, %v86, 0
  %v112 = vsel %vm101, %v87, 0
  %v115 = vsel %vm101, %v88, 0
  %v118 = vsel %vm101, %v89, 0
  %v121 = vsel %vm101, %v90, 0
  %v124 = vsel %vm101, %v91, 0
  %vm126 = vcmask 1043456
  %v128 = vsel %vm126, %v99, 0
  %130 = vmatpush.bf16.msra.mxu0 0
  %131 = vmatpush.bf16.msra.mxu0 0
  %132 = vmatpush.bf16.msra.mxu0 0
  %133 = vmatpush.bf16.msra.mxu0 0
  %134 = vmatpush.bf16.msra.mxu0 0
  %135 = vmatpush.bf16.msra.mxu0 0
  %136 = vmatpush.bf16.msra.mxu0 %v128
  %137 = vmatpush.bf16.msra.mxu0 %v98
  %138 = vmatmul.bf16.gmra.mxu0 %v103
  %v139 = vpop.f32.mrf.mxu0
  %v140 = vadd.f32 %v50, %v139
  %v141 = vpop.f32.mrf.mxu0
  %v142 = vadd.f32 %v50, %v141
  %143 = vmatmul.bf16.gmra.mxu0 %v106
  %v144 = vpop.f32.mrf.mxu0
  %v145 = vadd.f32 %v50, %v144
  %v146 = vpop.f32.mrf.mxu0
  %v147 = vadd.f32 %v50, %v146
  %148 = vmatmul.bf16.gmra.mxu0 %v109
  %v149 = vpop.f32.mrf.mxu0
  %v150 = vadd.f32 %v50, %v149
  %v151 = vpop.f32.mrf.mxu0
  %v152 = vadd.f32 %v50, %v151
  %153 = vmatmul.bf16.gmra.mxu0 %v112
  %v154 = vpop.f32.mrf.mxu0
  %v155 = vadd.f32 %v50, %v154
  %v156 = vpop.f32.mrf.mxu0
  %v157 = vadd.f32 %v50, %v156
  %158 = vmatmul.bf16.gmra.mxu0 %v115
  %v159 = vpop.f32.mrf.mxu0
  %v160 = vadd.f32 %v50, %v159
  %v161 = vpop.f32.mrf.mxu0
  %v162 = vadd.f32 %v50, %v161
  %163 = vmatmul.bf16.gmra.mxu0 %v118
  %v164 = vpop.f32.mrf.mxu0
  %v165 = vadd.f32 %v50, %v164
  %v166 = vpop.f32.mrf.mxu0
  %v167 = vadd.f32 %v50, %v166
  %168 = vmatmul.bf16.gmra.mxu0 %v121
  %v169 = vpop.f32.mrf.mxu0
  %v170 = vadd.f32 %v50, %v169
  %v171 = vpop.f32.mrf.mxu0
  %v172 = vadd.f32 %v50, %v171
  %173 = vmatmul.bf16.gmra.mxu0 %v124
  %v174 = vpop.f32.mrf.mxu0
  %v175 = vadd.f32 %v50, %v174
  %v176 = vpop.f32.mrf.mxu0
  %v177 = vadd.f32 %v50, %v176
  %178 = vdwg.mxu0
  %v179 = vpack.c.bf16 %v142, %v140
  %v180 = vpack.c.bf16 %v147, %v145
  %v181 = vpack.c.bf16 %v152, %v150
  %v182 = vpack.c.bf16 %v157, %v155
  %v183 = vpack.c.bf16 %v162, %v160
  %v184 = vpack.c.bf16 %v167, %v165
  %v185 = vpack.c.bf16 %v172, %v170
  %v186 = vpack.c.bf16 %v177, %v175
  %v187 = vunpack.c.l.bf16 %v179
  %v188 = vunpack.c.h.bf16 %v179
  %v189 = vunpack.c.l.bf16 %v180
  %v190 = vunpack.c.h.bf16 %v180
  %v191 = vunpack.c.l.bf16 %v181
  %v192 = vunpack.c.h.bf16 %v181
  %v193 = vunpack.c.l.bf16 %v182
  %v194 = vunpack.c.h.bf16 %v182
  %v195 = vunpack.c.l.bf16 %v183
  %v196 = vunpack.c.h.bf16 %v183
  %v197 = vunpack.c.l.bf16 %v184
  %v198 = vunpack.c.h.bf16 %v184
  %v199 = vunpack.c.l.bf16 %v185
  %v200 = vunpack.c.h.bf16 %v185
  %v201 = vunpack.c.l.bf16 %v186
  %v202 = vunpack.c.h.bf16 %v186
  %v203 = vtanh.pop %v187
  %v204 = vtanh.pop %v188
  %v205 = vtanh.pop %v189
  %v206 = vtanh.pop %v190
  %v207 = vtanh.pop %v191
  %v208 = vtanh.pop %v192
  %v209 = vtanh.pop %v193
  %v210 = vtanh.pop %v194
  %v211 = vtanh.pop %v195
  %v212 = vtanh.pop %v196
  %v213 = vtanh.pop %v197
  %v214 = vtanh.pop %v198
  %v215 = vtanh.pop %v199
  %v216 = vtanh.pop %v200
  %v217 = vtanh.pop %v201
  %v218 = vtanh.pop %v202
  %v219 = vpack.c.bf16 %v204, %v203
  %v220 = vpack.c.bf16 %v206, %v205
  %v221 = vpack.c.bf16 %v208, %v207
  %v222 = vpack.c.bf16 %v210, %v209
  %v223 = vpack.c.bf16 %v212, %v211
  %v224 = vpack.c.bf16 %v214, %v213
  %v225 = vpack.c.bf16 %v216, %v215
  %v226 = vpack.c.bf16 %v218, %v217
  %v227 = vld [vmem:[%s3] sm:$0xf]
  %v228 = vld [vmem:[%s3 + $0x4] sm:$0xf]
  %v229 = vld [vmem:[%s3 + $0x8] sm:$0xf]
  %v230 = vld [vmem:[%s3 + $0xc] sm:$0xf]
  %v231 = vld [vmem:[%s3 + $0x10] sm:$0xf]
  %v232 = vld [vmem:[%s3 + $0x14] sm:$0xf]
  %v233 = vld [vmem:[%s3 + $0x18] sm:$0xf]
  %v234 = vld [vmem:[%s3 + $0x1c] sm:$0xf]
  %v235 = vld [vmem:[%s3 + $0x20] sm:$0xf]
  %v236 = vld [vmem:[%s3 + $0x24] sm:$0xf]
  %v237 = vld [vmem:[%s3 + $0x28] sm:$0xf]
  %v238 = vld [vmem:[%s3 + $0x2c] sm:$0xf]
  %v239 = vld [vmem:[%s3 + $0x30] sm:$0xf]
  %v240 = vld [vmem:[%s3 + $0x34] sm:$0xf]
  %v241 = vld [vmem:[%s3 + $0x38] sm:$0xf]
  %v242 = vld [vmem:[%s3 + $0x3c] sm:$0xf]
  %v243 = vld [vmem:[%s4] sm:$0x1]
  %v245 = vperm.slane %v243, 0
  %v263 = vunpack.c.l.b16 %v227
  %v264 = vunpack.c.l.b16 %v228
  %v265 = vunpack.c.l.b16 %v229
  %v266 = vunpack.c.l.b16 %v230
  %v267 = vunpack.c.l.b16 %v231
  %v268 = vunpack.c.l.b16 %v232
  %v269 = vunpack.c.l.b16 %v233
  %v270 = vunpack.c.l.b16 %v234
  %v271 = vunpack.c.l.b16 %v235
  %v272 = vunpack.c.l.b16 %v236
  %v273 = vunpack.c.l.b16 %v237
  %v274 = vunpack.c.l.b16 %v238
  %v275 = vunpack.c.l.b16 %v239
  %v276 = vunpack.c.l.b16 %v240
  %v277 = vunpack.c.l.b16 %v241
  %v278 = vunpack.c.l.b16 %v242
  %v279 = vpack.c.b16 %v264, %v263
  %v280 = vpack.c.b16 %v266, %v265
  %v281 = vpack.c.b16 %v268, %v267
  %v282 = vpack.c.b16 %v270, %v269
  %v283 = vpack.c.b16 %v272, %v271
  %v284 = vpack.c.b16 %v274, %v273
  %v285 = vpack.c.b16 %v276, %v275
  %v286 = vpack.c.b16 %v278, %v277
  %295 = vmatpush.bf16.msra.mxu0 %v286
  %296 = vmatpush.bf16.msra.mxu0 %v285
  %297 = vmatpush.bf16.msra.mxu0 %v284
  %298 = vmatpush.bf16.msra.mxu0 %v283
  %299 = vmatpush.bf16.msra.mxu0 %v282
  %300 = vmatpush.bf16.msra.mxu0 %v281
  %301 = vmatpush.bf16.msra.mxu0 %v280
  %302 = vmatpush.bf16.msra.mxu0 %v279
  %303 = vmatmul.bf16.gmra.mxu0 %v219
  %v304 = vpop.f32.mrf.mxu0
  %v305 = vadd.f32 %v245, %v304
  %v306 = vpop.f32.mrf.mxu0
  %v307 = vadd.f32 %v245, %v306
  %308 = vmatmul.bf16.gmra.mxu0 %v220
  %v309 = vpop.f32.mrf.mxu0
  %v310 = vadd.f32 %v245, %v309
  %v311 = vpop.f32.mrf.mxu0
  %v312 = vadd.f32 %v245, %v311
  %313 = vmatmul.bf16.gmra.mxu0 %v221
  %v314 = vpop.f32.mrf.mxu0
  %v315 = vadd.f32 %v245, %v314
  %v316 = vpop.f32.mrf.mxu0
  %v317 = vadd.f32 %v245, %v316
  %318 = vmatmul.bf16.gmra.mxu0 %v222
  %v319 = vpop.f32.mrf.mxu0
  %v320 = vadd.f32 %v245, %v319
  %v321 = vpop.f32.mrf.mxu0
  %v322 = vadd.f32 %v245, %v321
  %323 = vmatmul.bf16.gmra.mxu0 %v223
  %v324 = vpop.f32.mrf.mxu0
  %v325 = vadd.f32 %v245, %v324
  %v326 = vpop.f32.mrf.mxu0
  %v327 = vadd.f32 %v245, %v326
  %328 = vmatmul.bf16.gmra.mxu0 %v224
  %v329 = vpop.f32.mrf.mxu0
  %v330 = vadd.f32 %v245, %v329
  %v331 = vpop.f32.mrf.mxu0
  %v332 = vadd.f32 %v245, %v331
  %333 = vmatmul.bf16.gmra.mxu0 %v225
  %v334 = vpop.f32.mrf.mxu0
  %v335 = vadd.f32 %v245, %v334
  %v336 = vpop.f32.mrf.mxu0
  %v337 = vadd.f32 %v245, %v336
  %338 = vmatmul.bf16.gmra.mxu0 %v226
  %v339 = vpop.f32.mrf.mxu0
  %v340 = vadd.f32 %v245, %v339
  %v341 = vpop.f32.mrf.mxu0
  %v342 = vadd.f32 %v245, %v341
  %343 = vdwg.mxu0
  %v344 = vpack.c.bf16 %v307, %v305
  %v345 = vpack.c.bf16 %v312, %v310
  %v346 = vpack.c.bf16 %v317, %v315
  %v347 = vpack.c.bf16 %v322, %v320
  %v348 = vpack.c.bf16 %v327, %v325
  %v349 = vpack.c.bf16 %v332, %v330
  %v350 = vpack.c.bf16 %v337, %v335
  %v351 = vpack.c.bf16 %v342, %v340
  %v352 = vunpack.c.l.bf16 %v344
  %v353 = vunpack.c.h.bf16 %v344
  %v354 = vunpack.c.l.bf16 %v345
  %v355 = vunpack.c.h.bf16 %v345
  %v356 = vunpack.c.l.bf16 %v346
  %v357 = vunpack.c.h.bf16 %v346
  %v358 = vunpack.c.l.bf16 %v347
  %v359 = vunpack.c.h.bf16 %v347
  %v360 = vunpack.c.l.bf16 %v348
  %v361 = vunpack.c.h.bf16 %v348
  %v362 = vunpack.c.l.bf16 %v349
  %v363 = vunpack.c.h.bf16 %v349
  %v364 = vunpack.c.l.bf16 %v350
  %v365 = vunpack.c.h.bf16 %v350
  %v366 = vunpack.c.l.bf16 %v351
  %v367 = vunpack.c.h.bf16 %v351
  %v368 = vtanh.pop %v352
  %v369 = vtanh.pop %v353
  %v370 = vtanh.pop %v354
  %v371 = vtanh.pop %v355
  %v372 = vtanh.pop %v356
  %v373 = vtanh.pop %v357
  %v374 = vtanh.pop %v358
  %v375 = vtanh.pop %v359
  %v376 = vtanh.pop %v360
  %v377 = vtanh.pop %v361
  %v378 = vtanh.pop %v362
  %v379 = vtanh.pop %v363
  %v380 = vtanh.pop %v364
  %v381 = vtanh.pop %v365
  %v382 = vtanh.pop %v366
  %v383 = vtanh.pop %v367
  %v384 = vpack.c.bf16 %v369, %v368
  %v385 = vpack.c.bf16 %v371, %v370
  %v386 = vpack.c.bf16 %v373, %v372
  %v387 = vpack.c.bf16 %v375, %v374
  %v388 = vpack.c.bf16 %v377, %v376
  %v389 = vpack.c.bf16 %v379, %v378
  %v390 = vpack.c.bf16 %v381, %v380
  %v391 = vpack.c.bf16 %v383, %v382
  %v392 = vld [vmem:[%s5] sm:$0xf]
  %v393 = vld [vmem:[%s5 + $0x4] sm:$0xf]
  %v394 = vld [vmem:[%s5 + $0x8] sm:$0xf]
  %v395 = vld [vmem:[%s5 + $0xc] sm:$0xf]
  %v396 = vld [vmem:[%s5 + $0x10] sm:$0xf]
  %v397 = vld [vmem:[%s5 + $0x14] sm:$0xf]
  %v398 = vld [vmem:[%s5 + $0x18] sm:$0xf]
  %v399 = vld [vmem:[%s5 + $0x1c] sm:$0xf]
  %v400 = vld [vmem:[%s5 + $0x20] sm:$0xf]
  %v401 = vld [vmem:[%s5 + $0x24] sm:$0xf]
  %v402 = vld [vmem:[%s5 + $0x28] sm:$0xf]
  %v403 = vld [vmem:[%s5 + $0x2c] sm:$0xf]
  %v404 = vld [vmem:[%s5 + $0x30] sm:$0xf]
  %v405 = vld [vmem:[%s5 + $0x34] sm:$0xf]
  %v406 = vld [vmem:[%s5 + $0x38] sm:$0xf]
  %v407 = vld [vmem:[%s5 + $0x3c] sm:$0xf]
  %v408 = vld [vmem:[#allocation2] sm:$0x1]
  %v410 = vperm.slane %v408, 0
  %v428 = vunpack.c.l.b16 %v392
  %v429 = vunpack.c.l.b16 %v393
  %v430 = vunpack.c.l.b16 %v394
  %v431 = vunpack.c.l.b16 %v395
  %v432 = vunpack.c.l.b16 %v396
  %v433 = vunpack.c.l.b16 %v397
  %v434 = vunpack.c.l.b16 %v398
  %v435 = vunpack.c.l.b16 %v399
  %v436 = vunpack.c.l.b16 %v400
  %v437 = vunpack.c.l.b16 %v401
  %v438 = vunpack.c.l.b16 %v402
  %v439 = vunpack.c.l.b16 %v403
  %v440 = vunpack.c.l.b16 %v404
  %v441 = vunpack.c.l.b16 %v405
  %v442 = vunpack.c.l.b16 %v406
  %v443 = vunpack.c.l.b16 %v407
  %v444 = vpack.c.b16 %v429, %v428
  %v445 = vpack.c.b16 %v431, %v430
  %v446 = vpack.c.b16 %v433, %v432
  %v447 = vpack.c.b16 %v435, %v434
  %v448 = vpack.c.b16 %v437, %v436
  %v449 = vpack.c.b16 %v439, %v438
  %v450 = vpack.c.b16 %v441, %v440
  %v451 = vpack.c.b16 %v443, %v442
  %460 = vmatpush.bf16.msra.mxu0 %v451
  %461 = vmatpush.bf16.msra.mxu0 %v450
  %462 = vmatpush.bf16.msra.mxu0 %v449
  %463 = vmatpush.bf16.msra.mxu0 %v448
  %464 = vmatpush.bf16.msra.mxu0 %v447
  %465 = vmatpush.bf16.msra.mxu0 %v446
  %466 = vmatpush.bf16.msra.mxu0 %v445
  %467 = vmatpush.bf16.msra.mxu0 %v444
  %468 = vmatmul.bf16.gmra.mxu0 %v384
  %v469 = vpop.f32.mrf.mxu0
  %v470 = vadd.f32 %v410, %v469
  %v471 = vpop.f32.mrf.mxu0
  %v472 = vadd.f32 %v410, %v471
  %473 = vmatmul.bf16.gmra.mxu0 %v385
  %v474 = vpop.f32.mrf.mxu0
  %v475 = vadd.f32 %v410, %v474
  %v476 = vpop.f32.mrf.mxu0
  %v477 = vadd.f32 %v410, %v476
  %478 = vmatmul.bf16.gmra.mxu0 %v386
  %v479 = vpop.f32.mrf.mxu0
  %v480 = vadd.f32 %v410, %v479
  %v481 = vpop.f32.mrf.mxu0
  %v482 = vadd.f32 %v410, %v481
  %483 = vmatmul.bf16.gmra.mxu0 %v387
  %v484 = vpop.f32.mrf.mxu0
  %v485 = vadd.f32 %v410, %v484
  %v486 = vpop.f32.mrf.mxu0
  %v487 = vadd.f32 %v410, %v486
  %488 = vmatmul.bf16.gmra.mxu0 %v388
  %v489 = vpop.f32.mrf.mxu0
  %v490 = vadd.f32 %v410, %v489
  %v491 = vpop.f32.mrf.mxu0
  %v492 = vadd.f32 %v410, %v491
  %493 = vmatmul.bf16.gmra.mxu0 %v389
  %v494 = vpop.f32.mrf.mxu0
  %v495 = vadd.f32 %v410, %v494
  %v496 = vpop.f32.mrf.mxu0
  %v497 = vadd.f32 %v410, %v496
  %498 = vmatmul.bf16.gmra.mxu0 %v390
  %v499 = vpop.f32.mrf.mxu0
  %v500 = vadd.f32 %v410, %v499
  %v501 = vpop.f32.mrf.mxu0
  %v502 = vadd.f32 %v410, %v501
  %503 = vmatmul.bf16.gmra.mxu0 %v391
  %v504 = vpop.f32.mrf.mxu0
  %v505 = vadd.f32 %v410, %v504
  %v506 = vpop.f32.mrf.mxu0
  %v507 = vadd.f32 %v410, %v506
  %508 = vdwg.mxu0
  %vm509 = vcmask 7168
  %510 = vst.msk [vmem:[%s7] sm:$0xff] %vm509, %v470
  %511 = vst.msk [vmem:[%s7 + $0x8] sm:$0xff] %vm509, %v472
  %512 = vst.msk [vmem:[%s7 + $0x10] sm:$0xff] %vm509, %v475
  %513 = vst.msk [vmem:[%s7 + $0x18] sm:$0xff] %vm509, %v477
  %514 = vst.msk [vmem:[%s7 + $0x20] sm:$0xff] %vm509, %v480
  %515 = vst.msk [vmem:[%s7 + $0x28] sm:$0xff] %vm509, %v482
  %516 = vst.msk [vmem:[%s7 + $0x30] sm:$0xff] %vm509, %v485
  %517 = vst.msk [vmem:[%s7 + $0x38] sm:$0xff] %vm509, %v487
  %518 = vst.msk [vmem:[%s7 + $0x40] sm:$0xff] %vm509, %v490
  %519 = vst.msk [vmem:[%s7 + $0x48] sm:$0xff] %vm509, %v492
  %520 = vst.msk [vmem:[%s7 + $0x50] sm:$0xff] %vm509, %v495
  %521 = vst.msk [vmem:[%s7 + $0x58] sm:$0xff] %vm509, %v497
  %522 = vst.msk [vmem:[%s7 + $0x60] sm:$0xff] %vm509, %v500
  %523 = vst.msk [vmem:[%s7 + $0x68] sm:$0xff] %vm509, %v502
  %524 = vst.msk [vmem:[%s7 + $0x70] sm:$0xff] %vm509, %v505
  %525 = vst.msk [vmem:[%s7 + $0x78] sm:$0xff] %vm509, %v507
  // Predicated region
  $region30: #{state_action_function.1} parent=0 // pred_check
    _
  $region31: #{state_action_function.1} parent=0 // pred_check_branch
    %527 = sbr.rel (0) target = $region33
  $region32: #{state_action_function.1} parent=0 // pred_region
    _
  $region33: #{state_action_function.1} parent=0 // pred_fallthru
    _
  // Predicated region
  $region34: #{state_action_function.1} parent=0 // pred_check
    _
  $region35: #{state_action_function.1} parent=0 // pred_check_branch
    %529 = sbr.rel (0) target = $region37
  $region36: #{state_action_function.1} parent=0 // pred_region
    _
  $region37: #{state_action_function.1} parent=0 // pred_fallthru
    _

</llo_original>
